<compile_context>
chip_gen: v7x
topology: tpu7x:2x2x1
jax: 0.10.0
libtpu: 0.0.40
codegen_flags: <defaults>
</compile_context>

<pallas_src>
import functools

import jax
import jax.numpy as jnp
from jax import lax
from jax.experimental import pallas as pl
from jax.experimental.pallas import tpu as pltpu

_EPS = 1e-6   # matches torch.nn.functional.pairwise_distance default eps (added to the diff)
_LANE = 128


def _cdiv(a, b):
    return (a + b - 1) // b


def _sublane_align(itemsize):
    # sublane packing: f32 -> 8, bf16 -> 16, int8/fp8 -> 32
    return max(8, 32 // max(int(itemsize), 1))


def _vmem_capacity_bytes():
    try:
        info = pltpu.get_tpu_info()
        cap = getattr(info, "vmem_capacity_bytes", None)
        if cap:
            return int(cap)
    except Exception:
        pass
    return 64 * 1024 * 1024  # assume the smallest current generation (v7x: 64 MiB) if query fails


def _input_budget_bytes(cap):
    # Budget for the double/triple-buffered input blocks, leaving headroom for the
    # compiler, output buffers and scratch.  v7x (64 MiB physical) -> ~40 MiB,
    # v5e/v6e (128 MiB physical) -> ~48 MiB (vmem_limit_bytes is raised explicitly).
    return min((cap * 5) // 8, 48 * 1024 * 1024)


def _choose_tiles(B, D, itemsize, budget):
    """Returns (tile_b, tile_d)."""
    align = _sublane_align(itemsize)

    # Never collapse the batch axis to a single grid step when it can be split:
    # >=2 steps keeps the DMA pipeline busy and lets v7x shard the batch over both TCs.
    if B >= 2 * align:
        tb_cap = align * _cdiv(B, 2 * align)
    else:
        tb_cap = B
    tb_cap = min(tb_cap, 8192)  # bound per-step latency / ragged-tail waste

    # 3 double-buffered inputs + f32 output row (2 buffers) + 2 f32 scratch rows.
    row_bytes = 3 * 2 * D * itemsize + 2 * 4 + 2 * 4
    if align * row_bytes <= budget:
        tb = min(tb_cap, budget // row_bytes)
        tb = B if tb >= B else max(align, (tb // align) * align)
        return tb, D

    # Huge feature dim: tile D as well (reduction axis, accumulated in VMEM scratch).
    tb = min(tb_cap, 256)
    tb = B if tb >= B else max(align, (tb // align) * align)
    col_bytes = 3 * 2 * tb * itemsize
    td = max(_LANE, (budget // max(col_bytes, 1)) // _LANE * _LANE)
    if td >= D:
        td = D
    return tb, td


def _triplet_loss_kernel(a_ref, p_ref, n_ref, out_ref, sp_ref, sn_ref, *,
                         margin, batch, tile_b, feat, tile_d, mask_cols):
    i = pl.program_id(0)        # batch tile ("parallel")
    j = pl.program_id(1)        # feature tile ("arbitrary" reduction axis)

    @pl.when(j == 0)
    def _():
        sp_ref[...] = jnp.zeros_like(sp_ref)
        sn_ref[...] = jnp.zeros_like(sn_ref)

    a = a_ref[...].astype(jnp.float32)
    p = p_ref[...].astype(jnp.float32)
    n = n_ref[...].astype(jnp.float32)

    # F.pairwise_distance(x1, x2, p=2, eps=1e-6) == ||x1 - x2 + eps||_2 along dim=-1
    dp = a - p + _EPS
    dn = a - n + _EPS
    if mask_cols:
        # Ragged final D tile: zero padded columns before squaring (static Python branch).
        col = j * tile_d + lax.broadcasted_iota(jnp.int32, (tile_b, tile_d), 1)
        valid = col < feat
        dp = jnp.where(valid, dp, 0.0)
        dn = jnp.where(valid, dn, 0.0)

    # keepdims row reductions -> (tile_b, 1): stays in natural sublane layout.
    sp_ref[...] += jnp.sum(dp * dp, axis=-1, keepdims=True)
    sn_ref[...] += jnp.sum(dn * dn, axis=-1, keepdims=True)

    @pl.when(j == pl.num_programs(1) - 1)
    def _():
        dist_p = jnp.sqrt(sp_ref[...])
        dist_n = jnp.sqrt(sn_ref[...])
        losses = jnp.maximum(dist_p - dist_n + jnp.float32(margin), 0.0)   # (tile_b, 1)
        # Zero padded rows of the ragged final batch tile so the outside sum is exact.
        row = i * tile_b + lax.broadcasted_iota(jnp.int32, (tile_b, 1), 0)
        out_ref[...] = jnp.where(row < batch, losses, 0.0)


def triplet_loss(anchor, positive, negative, margin=1.0, *, tile_b=None, tile_d=None):
    if anchor.ndim != 2:
        feat = anchor.shape[-1]
        anchor = anchor.reshape(-1, feat)
        positive = positive.reshape(-1, feat)
        negative = negative.reshape(-1, feat)
    B, D = anchor.shape
    itemsize = int(jnp.dtype(anchor.dtype).itemsize)
    align = _sublane_align(itemsize)

    cap = _vmem_capacity_bytes()
    budget = _input_budget_bytes(cap)
    tb_auto, td_auto = _choose_tiles(B, D, itemsize, budget)

    tb = tb_auto if tile_b is None else int(tile_b)
    td = td_auto if tile_d is None else int(tile_d)

    # Validate (user-supplied) tile sizes against TPU layout constraints.
    tb = min(tb, B)
    if tb < B and tb % align != 0:
        raise ValueError(
            f"tile_b={tb} must be a multiple of {align} for dtype {anchor.dtype} "
            f"(or >= batch={B}).")
    td = min(td, D)
    if td < D and td % _LANE != 0:
        raise ValueError(f"tile_d={td} must be a multiple of {_LANE} (or >= feature dim {D}).")

    num_b = _cdiv(B, tb)
    num_d = _cdiv(D, td)
    mask_cols = (num_d > 1) and (D % td != 0)

    # Small blocks leave DMA startup exposed; a third pipeline buffer hides it when there
    # are enough grid steps and VMEM headroom.
    block_bytes = tb * td * itemsize
    total_steps = num_b * num_d
    n_buf = 3 if (block_bytes < (512 << 10) and total_steps >= 4
                  and 3 * 3 * block_bytes <= budget) else 2

    if n_buf == 2:
        in_specs = [pl.BlockSpec((tb, td), lambda i, j: (i, j)) for _ in range(3)]
    else:
        in_specs = [pl.BlockSpec((tb, td), lambda i, j: (i, j),
                                 pipeline_mode=pl.Buffered(n_buf)) for _ in range(3)]

    # Explicit scoped-VMEM limit: what we actually use (+25% / +1 MiB slack), never assuming
    # the physical capacity (v5e/v6e 128 MiB, v7x 64 MiB) is fully available.
    needed = 3 * n_buf * block_bytes + 2 * tb * 4 + 2 * tb * 4 + (1 << 20)
    vmem_limit = int(min(cap - (4 << 20), max(needed + needed // 4, 16 << 20)))

    kernel = functools.partial(
        _triplet_loss_kernel, margin=float(margin), batch=B, tile_b=tb,
        feat=D, tile_d=td, mask_cols=mask_cols)

    per_row = pl.pallas_call(
        kernel,
        out_shape=jax.ShapeDtypeStruct((num_b * tb, 1), jnp.float32),
        grid=(num_b, num_d),
        in_specs=in_specs,
        out_specs=pl.BlockSpec((tb, 1), lambda i, j: (i, 0)),
        scratch_shapes=[pltpu.VMEM((tb, 1), jnp.float32),
                        pltpu.VMEM((tb, 1), jnp.float32)],
        compiler_params=pltpu.CompilerParams(
            dimension_semantics=("parallel", "arbitrary"),
            vmem_limit_bytes=vmem_limit,
        ),
    )(anchor, positive, negative)

    # Padded rows were zeroed in-kernel; mean over the true batch size, done outside
    # the kernel (tiny reduction, keeps the batch grid axis parallel).
    return jnp.sum(per_row) / jnp.float32(B)


def _reference_triplet_loss(anchor, positive, negative, margin=1.0):
    a = anchor.astype(jnp.float32)
    p = positive.astype(jnp.float32)
    n = negative.astype(jnp.float32)
    dp = jnp.sqrt(jnp.sum((a - p + _EPS) ** 2, axis=-1))
    dn = jnp.sqrt(jnp.sum((a - n + _EPS) ** 2, axis=-1))
    return jnp.mean(jnp.maximum(dp - dn + margin, 0.0))


def _check(loss, ref, tag):
    assert jnp.allclose(loss, ref, rtol=1e-5, atol=1e-5), (tag, loss, ref)


if __name__ == "__main__":
    key = jax.random.PRNGKey(0)
    k_a, k_p, k_n = jax.random.split(key, 3)

    # 1) Small embedding-batch shape consistent with the module's forward (single tile).
    B, D = 8, 32
    anchor = jax.random.normal(k_a, (B, D), dtype=jnp.float32)
    positive = jax.random.normal(k_p, (B, D), dtype=jnp.float32)
    negative = jax.random.normal(k_n, (B, D), dtype=jnp.float32)
    loss = triplet_loss(anchor, positive, negative, margin=1.0)
    jax.block_until_ready(loss)
    _check(loss, _reference_triplet_loss(anchor, positive, negative, margin=1.0), "small")

    # 2) Auto-tiled multi-batch-tile + ragged last batch tile (masked rows).
    B2, D2 = 300, 256
    a2 = jax.random.normal(jax.random.PRNGKey(1), (B2, D2), dtype=jnp.float32)
    p2 = jax.random.normal(jax.random.PRNGKey(2), (B2, D2), dtype=jnp.float32)
    n2 = jax.random.normal(jax.random.PRNGKey(3), (B2, D2), dtype=jnp.float32)
    loss2 = triplet_loss(a2, p2, n2, margin=0.5)
    jax.block_until_ready(loss2)
    _check(loss2, _reference_triplet_loss(a2, p2, n2, margin=0.5), "ragged-batch")

    # 3) D-tiling path (accumulated reduction axis, ragged masked D tile) + Buffered(3).
    B3, D3 = 64, 300
    a3 = jax.random.normal(jax.random.PRNGKey(4), (B3, D3), dtype=jnp.float32)
    p3 = jax.random.normal(jax.random.PRNGKey(5), (B3, D3), dtype=jnp.float32)
    n3 = jax.random.normal(jax.random.PRNGKey(6), (B3, D3), dtype=jnp.float32)
    loss3 = triplet_loss(a3, p3, n3, margin=1.0, tile_b=32, tile_d=128)
    jax.block_until_ready(loss3)
    _check(loss3, _reference_triplet_loss(a3, p3, n3, margin=1.0), "d-tiled")

    # 4) bf16 inputs (halved HBM traffic; in-kernel f32 upcast, bf16 sublane alignment).
    B4, D4 = 128, 64
    a4 = jax.random.normal(jax.random.PRNGKey(7), (B4, D4), dtype=jnp.bfloat16)
    p4 = jax.random.normal(jax.random.PRNGKey(8), (B4, D4), dtype=jnp.bfloat16)
    n4 = jax.random.normal(jax.random.PRNGKey(9), (B4, D4), dtype=jnp.bfloat16)
    loss4 = triplet_loss(a4, p4, n4, margin=1.0)
    jax.block_until_ready(loss4)
    _check(loss4, _reference_triplet_loss(a4, p4, n4, margin=1.0), "bf16")

    print("KERNEL_OK")
</pallas_src>

<mosaic_0001>
module attributes {stable_mosaic.version = 11 : i64} {
  func.func @_triplet_loss_kernel(%arg0: i32, %arg1: i32, %arg2: memref<8x32xf32, #tpu.memory_space<vmem>>, %arg3: memref<8x32xf32, #tpu.memory_space<vmem>>, %arg4: memref<8x32xf32, #tpu.memory_space<vmem>>, %arg5: memref<8x1xf32, #tpu.memory_space<vmem>>, %arg6: memref<8x1xf32, #tpu.memory_space<vmem>>, %arg7: memref<8x1xf32, #tpu.memory_space<vmem>>) attributes {dimension_semantics = [#tpu.dimension_semantics<parallel>, #tpu.dimension_semantics<arbitrary>], iteration_bounds = array<i64: 1, 1>, scalar_prefetch = 0 : i64, scratch_operands = 2 : i64, tpu.core_type = #tpu.core_type<tc>, window_params = [{transform_indices = @transform_0, window_bounds = array<i64: 8, 32>}, {transform_indices = @transform_1, window_bounds = array<i64: 8, 32>}, {transform_indices = @transform_2, window_bounds = array<i64: 8, 32>}, {transform_indices = @transform_3, window_bounds = array<i64: 8, 1>}]} {
    %c0_i32 = arith.constant 0 : i32
    %0 = arith.cmpi eq, %arg1, %c0_i32 : i32
    %1 = arith.extui %0 : i1 to i32
    %c0_i32_0 = arith.constant 0 : i32
    %2 = arith.cmpi ne, %1, %c0_i32_0 : i32
    scf.if %2 {
      %cst_19 = arith.constant 0.000000e+00 : f32
      %27 = vector.broadcast %cst_19 : f32 to vector<8x1xf32>
      %c0_20 = arith.constant 0 : index
      %c0_21 = arith.constant 0 : index
      %28 = vector.load %arg6[%c0_20, %c0_21] : memref<8x1xf32, #tpu.memory_space<vmem>>, vector<8x1xf32>
      tpu.vector_store %arg6[%c0_20, %c0_21], %27 {strides = array<i32>} : memref<8x1xf32, #tpu.memory_space<vmem>>, vector<8x1xf32>,
      %cst_22 = arith.constant 0.000000e+00 : f32
      %29 = vector.broadcast %cst_22 : f32 to vector<8x1xf32>
      %c0_23 = arith.constant 0 : index
      %c0_24 = arith.constant 0 : index
      %30 = vector.load %arg7[%c0_23, %c0_24] : memref<8x1xf32, #tpu.memory_space<vmem>>, vector<8x1xf32>
      tpu.vector_store %arg7[%c0_23, %c0_24], %29 {strides = array<i32>} : memref<8x1xf32, #tpu.memory_space<vmem>>, vector<8x1xf32>,
    } else {
    }
    %c0 = arith.constant 0 : index
    %c0_1 = arith.constant 0 : index
    %3 = vector.load %arg2[%c0, %c0_1] : memref<8x32xf32, #tpu.memory_space<vmem>>, vector<8x32xf32>
    %c0_2 = arith.constant 0 : index
    %c0_3 = arith.constant 0 : index
    %4 = vector.load %arg3[%c0_2, %c0_3] : memref<8x32xf32, #tpu.memory_space<vmem>>, vector<8x32xf32>
    %c0_4 = arith.constant 0 : index
    %c0_5 = arith.constant 0 : index
    %5 = vector.load %arg4[%c0_4, %c0_5] : memref<8x32xf32, #tpu.memory_space<vmem>>, vector<8x32xf32>
    %6 = arith.subf %3, %4 : vector<8x32xf32>
    %cst = arith.constant 9.99999997E-7 : f32
    %7 = vector.broadcast %cst : f32 to vector<8x32xf32>
    %8 = arith.addf %6, %7 : vector<8x32xf32>
    %9 = arith.subf %3, %5 : vector<8x32xf32>
    %cst_6 = arith.constant 9.99999997E-7 : f32
    %10 = vector.broadcast %cst_6 : f32 to vector<8x32xf32>
    %11 = arith.addf %9, %10 : vector<8x32xf32>
    %c0_7 = arith.constant 0 : index
    %c0_8 = arith.constant 0 : index
    %12 = vector.load %arg6[%c0_7, %c0_8] : memref<8x1xf32, #tpu.memory_space<vmem>>, vector<8x1xf32>
    %13 = arith.mulf %8, %8 : vector<8x32xf32>
    %cst_9 = arith.constant dense<0.000000e+00> : vector<8xf32>
    %14 = vector.multi_reduction <add>, %13, %cst_9 [1] : vector<8x32xf32> to vector<8xf32>
    %15 = vector.shape_cast %14 : vector<8xf32> to vector<8x1xf32>
    %16 = arith.addf %12, %15 : vector<8x1xf32>
    %c0_10 = arith.constant 0 : index
    %c0_11 = arith.constant 0 : index
    %17 = vector.load %arg6[%c0_10, %c0_11] : memref<8x1xf32, #tpu.memory_space<vmem>>, vector<8x1xf32>
    tpu.vector_store %arg6[%c0_10, %c0_11], %16 {strides = array<i32>} : memref<8x1xf32, #tpu.memory_space<vmem>>, vector<8x1xf32>,
    %c0_12 = arith.constant 0 : index
    %c0_13 = arith.constant 0 : index
    %18 = vector.load %arg7[%c0_12, %c0_13] : memref<8x1xf32, #tpu.memory_space<vmem>>, vector<8x1xf32>
    %19 = arith.mulf %11, %11 : vector<8x32xf32>
    %cst_14 = arith.constant dense<0.000000e+00> : vector<8xf32>
    %20 = vector.multi_reduction <add>, %19, %cst_14 [1] : vector<8x32xf32> to vector<8xf32>
    %21 = vector.shape_cast %20 : vector<8xf32> to vector<8x1xf32>
    %22 = arith.addf %18, %21 : vector<8x1xf32>
    %c0_15 = arith.constant 0 : index
    %c0_16 = arith.constant 0 : index
    %23 = vector.load %arg7[%c0_15, %c0_16] : memref<8x1xf32, #tpu.memory_space<vmem>>, vector<8x1xf32>
    tpu.vector_store %arg7[%c0_15, %c0_16], %22 {strides = array<i32>} : memref<8x1xf32, #tpu.memory_space<vmem>>, vector<8x1xf32>,
    %c0_i32_17 = arith.constant 0 : i32
    %24 = arith.cmpi eq, %arg1, %c0_i32_17 : i32
    %25 = arith.extui %24 : i1 to i32
    %c0_i32_18 = arith.constant 0 : i32
    %26 = arith.cmpi ne, %25, %c0_i32_18 : i32
    scf.if %26 {
      %c0_19 = arith.constant 0 : index
      %c0_20 = arith.constant 0 : index
      %27 = vector.load %arg6[%c0_19, %c0_20] : memref<8x1xf32, #tpu.memory_space<vmem>>, vector<8x1xf32>
      %28 = math.sqrt %27 : vector<8x1xf32>
      %c0_21 = arith.constant 0 : index
      %c0_22 = arith.constant 0 : index
      %29 = vector.load %arg7[%c0_21, %c0_22] : memref<8x1xf32, #tpu.memory_space<vmem>>, vector<8x1xf32>
      %30 = math.sqrt %29 : vector<8x1xf32>
      %31 = arith.subf %28, %30 : vector<8x1xf32>
      %cst_23 = arith.constant 1.000000e+00 : f32
      %32 = vector.broadcast %cst_23 : f32 to vector<8x1xf32>
      %33 = arith.addf %31, %32 : vector<8x1xf32>
      %cst_24 = arith.constant 0.000000e+00 : f32
      %34 = vector.broadcast %cst_24 : f32 to vector<8x1xf32>
      %35 = arith.maximumf %33, %34 : vector<8x1xf32>
      %c8_i32 = arith.constant 8 : i32
      %36 = arith.muli %arg0, %c8_i32 : i32
      %37 = tpu.iota {dimensions = array<i32: 0>} : vector<8x1xi32>
      %38 = vector.broadcast %36 : i32 to vector<8x1xi32>
      %39 = arith.addi %38, %37 : vector<8x1xi32>
      %c8_i32_25 = arith.constant 8 : i32
      %40 = vector.broadcast %c8_i32_25 : i32 to vector<8x1xi32>
      %41 = arith.cmpi slt, %39, %40 : vector<8x1xi32>
      %cst_26 = arith.constant 0.000000e+00 : f32
      %42 = vector.broadcast %cst_26 : f32 to vector<8x1xf32>
      %43 = arith.select %41, %35, %42 : vector<8x1xi1>, vector<8x1xf32>
      %c0_27 = arith.constant 0 : index
      %c0_28 = arith.constant 0 : index
      %44 = vector.load %arg5[%c0_27, %c0_28] : memref<8x1xf32, #tpu.memory_space<vmem>>, vector<8x1xf32>
      tpu.vector_store %arg5[%c0_27, %c0_28], %43 {strides = array<i32>} : memref<8x1xf32, #tpu.memory_space<vmem>>, vector<8x1xf32>,
    } else {
    }
    return
  }
  func.func @transform_0(%arg0: i32, %arg1: i32) -> (i32, i32) {
    %c0_i32 = arith.constant 0 : i32
    return %arg0, %arg1 : i32, i32
  }
  func.func @transform_1(%arg0: i32, %arg1: i32) -> (i32, i32) {
    %c0_i32 = arith.constant 0 : i32
    return %arg0, %arg1 : i32, i32
  }
  func.func @transform_2(%arg0: i32, %arg1: i32) -> (i32, i32) {
    %c0_i32 = arith.constant 0 : i32
    return %arg0, %arg1 : i32, i32
  }
  func.func @transform_3(%arg0: i32, %arg1: i32) -> (i32, i32) {
    %c0_i32 = arith.constant 0 : i32
    %c0_i32_0 = arith.constant 0 : i32
    return %arg0, %c0_i32 : i32, i32
  }
}

</mosaic_0001>

<llo_original>
// kernel: tpu_custom_call.1
$region0: #{tpu_custom_call.1}
  #allocation0 [shape = 'u32[]', space=smem, size = 0x4, offset = 0x4, fixed_abs, tag = 'smem constant byte address 0x4 - core index']
  #allocation1 [shape = 'u32[144,128]{1,0:T(1,128)}', space=vmem, size = 0x12000, scoped, tag = 'internal scratch']
  #allocation2 [shape = 'f32[8,1]{1,0:T(8,128)}', space=vmem, size = 0x1000, scoped, tag = 'scratch operand']
  #allocation3 [shape = 'f32[8,1]{1,0:T(8,128)}', space=vmem, size = 0x1000, scoped, tag = 'scratch operand']
  %s0 = inlined_call_operand.hbm [shape: f32[8,32], index: 0, kind: input, shape index: {}]
  %s1 = inlined_call_operand.hbm [shape: f32[8,32], index: 1, kind: input, shape index: {}]
  %s2 = inlined_call_operand.hbm [shape: f32[8,32], index: 2, kind: input, shape index: {}]
  %s3 = inlined_call_operand.vmem [shape: f32[8,1], index: 3, kind: output, shape index: {}]
  %s4 = sld [smem:[#allocation0]]
  $region42: #{tpu_custom_call.1} parent=0
    _
  %s6 = ssub.s32 1, %s4
  %s7 = scalar_select 0, %s6, %s4
  $region1: #{tpu_custom_call.1} parent=0
    #allocation4 [shape = 'u8[4096]{0}', space=vmem, size = 0x1000, scoped, tag = 'input window, operand 0, single buffered']
    #allocation5 [shape = 's32[1]{0}', space=sflag, size = 0x4, scoped, tag = 'scoped memory for tpu_custom_call.1']
    #allocation6 [shape = 'u8[4096]{0}', space=vmem, size = 0x1000, scoped, tag = 'input window, operand 1, single buffered']
    #allocation7 [shape = 's32[1]{0}', space=sflag, size = 0x4, scoped, tag = 'scoped memory for tpu_custom_call.1']
    #allocation8 [shape = 'u8[4096]{0}', space=vmem, size = 0x1000, scoped, tag = 'input window, operand 2, single buffered']
    %8 = vsyncpa [#allocation5], 0
    %9 = vsyncpa [#allocation7], 0
    // Predicated region
    $region2: #{tpu_custom_call.1} parent=1 // pred_check
      _
    $region3: #{tpu_custom_call.1} parent=1 // pred_check_branch
      %11 = sbr.rel (0) target = $region5
    $region4: #{tpu_custom_call.1} parent=1 // pred_region
      %s13 = ssub.s32 128, 128
      %14 = vsyncadd [#allocation5], %s13
      %s16 = sshll.u32 [#allocation4], 4
      %s17 = int_to_ptr.vmem [resolvable:$true] %s16
      %19 = dma.hbm_to_vmem [thread:$0]  %s0, 128, %s17, [#allocation5]
    $region5: #{tpu_custom_call.1} parent=1 // pred_fallthru
      _
    // Predicated region
    $region6: #{tpu_custom_call.1} parent=1 // pred_check
      _
    $region7: #{tpu_custom_call.1} parent=1 // pred_check_branch
      %21 = sbr.rel (0) target = $region9
    $region8: #{tpu_custom_call.1} parent=1 // pred_region
      %s23 = ssub.s32 128, 128
      %24 = vsyncadd [#allocation7], %s23
      %s26 = sshll.u32 [#allocation6], 4
      %s27 = int_to_ptr.vmem [resolvable:$true] %s26
      %29 = dma.hbm_to_vmem [thread:$0]  %s1, 128, %s27, [#allocation7]
    $region9: #{tpu_custom_call.1} parent=1 // pred_fallthru
      _
    // Predicated region
    $region10: #{tpu_custom_call.1} parent=1 // pred_check
      _
    $region11: #{tpu_custom_call.1} parent=1 // pred_check_branch
      %31 = sbr.rel (0) target = $region13
    $region12: #{tpu_custom_call.1} parent=1 // pred_region
      %s33 = ssub.s32 128, 128
      %34 = vsyncadd [#allocation7], %s33
      %s36 = sshll.u32 [#allocation8], 4
      %s37 = int_to_ptr.vmem [resolvable:$true] %s36
      %39 = dma.hbm_to_vmem [thread:$0]  %s2, 128, %s37, [#allocation7]
    $region13: #{tpu_custom_call.1} parent=1 // pred_fallthru
      _
    // Predicated region
    $region14: #{tpu_custom_call.1} parent=1 // pred_check
      _
    $region15: #{tpu_custom_call.1} parent=1 // pred_check_branch
      %41 = sbr.rel (0) target = $region17
    $region16: #{tpu_custom_call.1} parent=1 // pred_region
      %42 = dma.done [#allocation5], 128
    $region17: #{tpu_custom_call.1} parent=1 // pred_fallthru
      _
    // Predicated region
    $region18: #{tpu_custom_call.1} parent=1 // pred_check
      _
    $region19: #{tpu_custom_call.1} parent=1 // pred_check_branch
      %44 = sbr.rel (0) target = $region21
    $region20: #{tpu_custom_call.1} parent=1 // pred_region
      %45 = dma.done [#allocation7], 128
    $region21: #{tpu_custom_call.1} parent=1 // pred_fallthru
      _
    // Predicated region
    $region22: #{tpu_custom_call.1} parent=1 // pred_check
      _
    $region23: #{tpu_custom_call.1} parent=1 // pred_check_branch
      %47 = sbr.rel (0) target = $region25
    $region24: #{tpu_custom_call.1} parent=1 // pred_region
      %48 = dma.done [#allocation7], 128
    $region25: #{tpu_custom_call.1} parent=1 // pred_fallthru
      _
    %p49 = scmp.eq.s32.totalorder 0, 0
    // Predicated region
    $region26: #{tpu_custom_call.1} parent=1 // pred_check
      %p50 = pneg %p49
    $region27: #{tpu_custom_call.1} parent=1 // pred_check_branch
      %52 = sbr.rel (%p50) target = $region29
    $region28: #{tpu_custom_call.1} parent=1 // pred_region
      %vm53 = vcmask 7168
      %54 = vst.msk [vmem:[#allocation2] sm:$0xff] %vm53, 0.0
      %55 = vst.msk [vmem:[#allocation3] sm:$0xff] %vm53, 0.0
    $region29: #{tpu_custom_call.1} parent=1 // pred_fallthru
      _
    %v56 = vld [vmem:[#allocation4] sm:$0xff]
    %v57 = vld [vmem:[#allocation6] sm:$0xff]
    %v58 = vld [vmem:[#allocation8] sm:$0xff]
    %v59 = vsub.f32 %v56, %v57
    %v60 = vadd.f32 %v59, 1e-06
    %v61 = vsub.f32 %v56, %v58
    %v62 = vadd.f32 %v61, 1e-06
    %v63 = vld [vmem:[#allocation2] sm:$0xff]
    %v64 = vmul.f32 %v60, %v60
    %vm65 = vcmask 261120
    %v66 = vsel %vm65, %v64, 0.0
    %67 = vadd.xlane.f32.xlu0 %v66
    %v68 = vpop.xlane.xlu0 %67
    %v69 = vadd.f32 %v63, %v68
    %vm70 = vcmask 7168
    %71 = vst.msk [vmem:[#allocation2] sm:$0xff] %vm70, %v69
    %v72 = vld [vmem:[#allocation3] sm:$0xff]
    %v73 = vmul.f32 %v62, %v62
    %v74 = vsel %vm65, %v73, 0.0
    %75 = vadd.xlane.f32.xlu0 %v74
    %v76 = vpop.xlane.xlu0 %75
    %v77 = vadd.f32 %v72, %v76
    %78 = vst.msk [vmem:[#allocation3] sm:$0xff] %vm70, %v77
    // Predicated region
    $region30: #{tpu_custom_call.1} parent=1 // pred_check
      %p79 = pneg %p49
    $region31: #{tpu_custom_call.1} parent=1 // pred_check_branch
      %81 = sbr.rel (%p79) target = $region33
    $region32: #{tpu_custom_call.1} parent=1 // pred_region
      %v82 = vld [vmem:[#allocation2] sm:$0xff]
      %v83 = vrsqrt.pop %v82
      %v84 = vmul.f32 %v82, %v83
      %vm85 = vcmp.eq.f32.partialorder %v82, inf
      %v86 = vsel %vm85, %v82, %v84
      %vm87 = vcmp.eq.f32.partialorder %v82, 0.0
      %v88 = vand.u32 %v82, 2147483648
      %v89 = vsel %vm87, %v88, %v86
      %v90 = vld [vmem:[#allocation3] sm:$0xff]
      %v91 = vrsqrt.pop %v90
      %v92 = vmul.f32 %v90, %v91
      %vm93 = vcmp.eq.f32.partialorder %v90, inf
      %v94 = vsel %vm93, %v90, %v92
      %vm95 = vcmp.eq.f32.partialorder %v90, 0.0
      %v96 = vand.u32 %v90, 2147483648
      %v97 = vsel %vm95, %v96, %v94
      %v98 = vsub.f32 %v89, %v97
      %v99 = vadd.f32 %v98, 1.0
      %v100 = vmax.f32 %v99, 0.0
      %s101 = smul.u32 0, 8
      %v102 = vlaneseq
      %v103 = vshrl.u32 %v102, 7
      %v104 = vstv %s101
      %v105 = vadd.s32 %v104, %v103
      %vm106 = vcmp.lt.s32.totalorder %v105, 8
      %v107 = vsel %vm106, %v100, 0.0
      %108 = vst.msk [vmem:[%s3] sm:$0xff] %vm70, %v107
    $region33: #{tpu_custom_call.1} parent=1 // pred_fallthru
      _
    // Predicated region
    $region34: #{tpu_custom_call.1} parent=1 // pred_check
      _
    $region35: #{tpu_custom_call.1} parent=1 // pred_check_branch
      %110 = sbr.rel (0) target = $region37
    $region36: #{tpu_custom_call.1} parent=1 // pred_region
      _
    $region37: #{tpu_custom_call.1} parent=1 // pred_fallthru
      _
    // Predicated region
    $region38: #{tpu_custom_call.1} parent=1 // pred_check
      _
    $region39: #{tpu_custom_call.1} parent=1 // pred_check_branch
      %112 = sbr.rel (0) target = $region41
    $region40: #{tpu_custom_call.1} parent=1 // pred_region
      _
    $region41: #{tpu_custom_call.1} parent=1 // pred_fallthru
      _
    %113 = vsyncpa [#allocation5], 1
    %114 = vsyncpa [#allocation7], 1

</llo_original>
